<compile_context>
chip_gen: v7x
topology: tpu7x:2x2x1
jax: 0.10.0
libtpu: 0.0.40
codegen_flags: <defaults>
</compile_context>

<pallas_src>
import functools
import math

import jax
import jax.numpy as jnp
from jax.experimental import pallas as pl
from jax.experimental.pallas import tpu as pltpu


def _round_up(x, m):
    return ((x + m - 1) // m) * m


def _vmem_capacity_bytes():
    try:
        return int(pltpu.get_tpu_info().vmem_capacity_bytes)
    except Exception:
        return 64 * 1024 * 1024  # v7x per-core VMEM; conservative fallback


def _gelu_f32(h, approximate):
    """GELU on an f32 array.

    approximate=False: exact erf GELU (matches torch.nn.GELU() default).
    approximate=True : tanh approximation -> one EUP tanh (otherwise-idle slot
        on v6e/v7x) plus a handful of VALU ops, instead of the long erf
        polynomial that makes the VALU the binding unit on v6e/v7x.
    """
    if approximate:
        c = math.sqrt(2.0 / math.pi)
        return 0.5 * h * (1.0 + jnp.tanh(c * (h + 0.044715 * (h * h * h))))
    return 0.5 * h * (1.0 + jax.lax.erf(h * (1.0 / math.sqrt(2.0))))


# ---------------------------------------------------------------------------
# Kernel 1: weights resident in VMEM (1-D grid over row tiles).
# ---------------------------------------------------------------------------
def _mlp_kernel_resident(x_ref, w1_ref, b1_ref, w2_ref, b2_ref, o_ref,
                         *, compute_dtype, approximate):
    x = x_ref[...].astype(compute_dtype)              # in-kernel cast (cheap)
    h = jnp.dot(x, w1_ref[...], preferred_element_type=jnp.float32)
    h = _gelu_f32(h + b1_ref[...], approximate)       # bias + GELU in f32
    h = h.astype(compute_dtype)
    out = jnp.dot(h, w2_ref[...], preferred_element_type=jnp.float32)
    o_ref[...] = (out + b2_ref[...]).astype(o_ref.dtype)


# ---------------------------------------------------------------------------
# Kernel 2: hidden dim tiled (grid = rows x H-tiles) with an f32 accumulator
# in scratch -- VMEM bounded independent of H (needed for big H on v7x).
# ---------------------------------------------------------------------------
def _mlp_kernel_htiled(x_ref, w1_ref, b1_ref, w2_ref, b2_ref, o_ref, acc_ref,
                       *, compute_dtype, approximate):
    k = pl.program_id(1)

    @pl.when(k == 0)
    def _():
        acc_ref[...] = jnp.zeros_like(acc_ref)

    x = x_ref[...].astype(compute_dtype)
    h = jnp.dot(x, w1_ref[...], preferred_element_type=jnp.float32)
    h = _gelu_f32(h + b1_ref[...], approximate)
    h = h.astype(compute_dtype)
    acc_ref[...] += jnp.dot(h, w2_ref[...], preferred_element_type=jnp.float32)

    @pl.when(k == pl.num_programs(1) - 1)
    def _():
        o_ref[...] = (acc_ref[...] + b2_ref[...]).astype(o_ref.dtype)


def mlp_forward(x, w1, b1, w2, b2, *, tm=512, th=None,
                compute_dtype=jnp.bfloat16, out_dtype=None,
                gelu_approximate=False):
    """Fused fc2(GELU(fc1(x))).

    x: [..., Din]; w1: [Din, H]; b1: [H]; w2: [H, Dout]; b2: [Dout].
    """
    *lead, Din = x.shape
    H = w1.shape[1]
    Dout = w2.shape[1]
    out_dtype = out_dtype or x.dtype
    rows = math.prod(lead) if lead else 1

    xbytes = jnp.dtype(x.dtype).itemsize
    obytes = jnp.dtype(out_dtype).itemsize
    cbytes = jnp.dtype(compute_dtype).itemsize
    vmem_cap = _vmem_capacity_bytes()

    # Lane (last) dims -> multiples of 128 (lane-dense, unmasked stores).
    Dinp = _round_up(Din, 128)
    Doutp = _round_up(Dout, 128)

    # ---- row tiling (with working megacore split) -----------------------
    MIN_TM = 256
    rows_al = _round_up(rows, 8)
    tm = max(8, min(_round_up(tm, 8), rows_al))
    # If everything fits one row tile but there is enough work for two
    # 256-aligned tiles, split so the "parallel" axis can shard across the two
    # TensorCores of a v7x chip.  Cost on v5e/v6e: one extra ~0.35us grid step
    # on >= 512-row problems -> negligible.
    if pl.cdiv(rows_al, tm) == 1 and rows_al >= 2 * MIN_TM:
        tm = _round_up(pl.cdiv(rows_al, 2), MIN_TM)
    rows_p = _round_up(rows, tm)
    grid_m = rows_p // tm

    # ---- choose resident-weights vs H-tiled path ------------------------
    Hp_full = _round_up(H, 128)

    def _resident_vmem(wbuf):
        return (2 * tm * Dinp * xbytes                       # x tiles (double buffered)
                + 2 * tm * Doutp * obytes                    # out tiles (double buffered)
                + wbuf * (Dinp * Hp_full + Hp_full * Doutp) * cbytes   # W1, W2
                + wbuf * (Hp_full + Doutp) * 4               # b1, b2 (f32)
                + tm * Dinp * cbytes                         # in-kernel cast copy of x
                + tm * Hp_full * (4 + cbytes)                # f32 h + compute-dtype h
                + tm * Doutp * 4)                            # f32 result before store

    use_h_tiling = (th is not None) or (_resident_vmem(1) > 0.7 * vmem_cap)

    if not use_h_tiling:
        Hp = Hp_full
        grid_h = 1
    else:
        if th is None:
            # Pick the largest 128-multiple hidden tile that keeps everything
            # (double-buffered W1/W2 slices + intermediates) under ~70% VMEM.
            fixed = (2 * tm * Dinp * xbytes + 2 * tm * Doutp * obytes
                     + tm * Dinp * cbytes + 2 * tm * Doutp * 4 + Doutp * 4)
            per_th = 2 * (Dinp + Doutp) * cbytes + 8 + tm * (4 + cbytes)
            budget = int(0.7 * vmem_cap) - fixed
            th = max(128, (budget // max(per_th, 1)) // 128 * 128)
        th = min(_round_up(max(int(th), 128), 128), _round_up(H, 128))
        Hp = _round_up(H, th)
        grid_h = Hp // th

    # ---- prepare operands ------------------------------------------------
    # x: no wrapper-side cast (the cast to compute_dtype happens per-tile in
    # the kernel); skip the pad entirely when already aligned.
    x2d = x.reshape(rows, Din)
    if rows_p != rows or Dinp != Din:
        x2d = jnp.pad(x2d, ((0, rows_p - rows), (0, Dinp - Din)))

    # Weights/biases: cast + zero-pad.  They are reused across calls -- in a
    # full model hoist this prep out of the per-token path; it is inline here
    # only to keep the function self-contained.  Zero padding is
    # semantics-preserving (gelu(0)=0 and padded W2 rows are 0).
    w1p = jnp.pad(w1.astype(compute_dtype), ((0, Dinp - Din), (0, Hp - H)))
    w2p = jnp.pad(w2.astype(compute_dtype), ((0, Hp - H), (0, Doutp - Dout)))
    b1p = jnp.pad(b1.astype(jnp.float32), (0, Hp - H)).reshape(1, Hp)
    b2p = jnp.pad(b2.astype(jnp.float32), (0, Doutp - Dout)).reshape(1, Doutp)

    cost = pl.CostEstimate(
        flops=2 * rows_p * (Dinp * Hp + Hp * Doutp),
        transcendentals=rows_p * Hp,                    # erf / tanh in the GELU
        bytes_accessed=(x2d.size * xbytes + w1p.size * cbytes + w2p.size * cbytes
                        + b1p.size * 4 + b2p.size * 4 + rows_p * Doutp * obytes),
    )

    if not use_h_tiling:
        kern = functools.partial(_mlp_kernel_resident,
                                 compute_dtype=compute_dtype,
                                 approximate=gelu_approximate)

        def build(single_buffer_weights):
            wbuf = 1 if single_buffer_weights else 2
            vmem_limit = min(int(_resident_vmem(wbuf) * 1.2) + (8 << 20),
                             int(0.9 * vmem_cap))

            def wspec(shape):
                # Constant index_map -> block never changes; a single buffer
                # is enough and halves resident-weight VMEM (key on v7x).
                if single_buffer_weights:
                    return pl.BlockSpec(shape, lambda i: (0, 0),
                                        pipeline_mode=pl.Buffered(1))
                return pl.BlockSpec(shape, lambda i: (0, 0))

            return pl.pallas_call(
                kern,
                out_shape=jax.ShapeDtypeStruct((rows_p, Doutp), out_dtype),
                grid_spec=pltpu.PrefetchScalarGridSpec(
                    num_scalar_prefetch=0,
                    grid=(grid_m,),
                    in_specs=[
                        pl.BlockSpec((tm, Dinp), lambda i: (i, 0)),  # x row tile
                        wspec((Dinp, Hp)),                           # W1 (resident)
                        wspec((1, Hp)),                              # b1
                        wspec((Hp, Doutp)),                          # W2 (resident)
                        wspec((1, Doutp)),                           # b2
                    ],
                    out_specs=pl.BlockSpec((tm, Doutp), lambda i: (i, 0)),
                ),
                compiler_params=pltpu.CompilerParams(
                    dimension_semantics=("parallel",),
                    vmem_limit_bytes=int(vmem_limit),
                ),
                cost_estimate=cost,
            )

        try:
            out2d = build(True)(x2d, w1p, b1p, w2p, b2p)
        except Exception:
            # pipeline_mode / Buffered(1) unavailable -> default double buffering.
            out2d = build(False)(x2d, w1p, b1p, w2p, b2p)
    else:
        kern = functools.partial(_mlp_kernel_htiled,
                                 compute_dtype=compute_dtype,
                                 approximate=gelu_approximate)
        vmem_bytes = (2 * tm * Dinp * xbytes + 2 * tm * Doutp * obytes
                      + 2 * (Dinp * th + th * Doutp) * cbytes   # W1/W2 slices (x2 bufs)
                      + 2 * (th + Doutp) * 4                    # bias slices
                      + tm * Dinp * cbytes                      # cast copy of x
                      + tm * th * (4 + cbytes)                  # f32 h + compute-dtype h
                      + 2 * tm * Doutp * 4)                     # acc scratch + pre-store
        vmem_limit = min(int(vmem_bytes * 1.2) + (8 << 20), int(0.9 * vmem_cap))

        out2d = pl.pallas_call(
            kern,
            out_shape=jax.ShapeDtypeStruct((rows_p, Doutp), out_dtype),
            grid_spec=pltpu.PrefetchScalarGridSpec(
                num_scalar_prefetch=0,
                grid=(grid_m, grid_h),                 # reduction (H) axis last
                in_specs=[
                    pl.BlockSpec((tm, Dinp), lambda i, k: (i, 0)),   # x (resident over k)
                    pl.BlockSpec((Dinp, th), lambda i, k: (0, k)),   # W1 H-slice
                    pl.BlockSpec((1, th), lambda i, k: (0, k)),      # b1 H-slice
                    pl.BlockSpec((th, Doutp), lambda i, k: (k, 0)),  # W2 H-slice
                    pl.BlockSpec((1, Doutp), lambda i, k: (0, 0)),   # b2
                ],
                out_specs=pl.BlockSpec((tm, Doutp), lambda i, k: (i, 0)),
                scratch_shapes=[pltpu.VMEM((tm, Doutp), jnp.float32)],
            ),
            compiler_params=pltpu.CompilerParams(
                dimension_semantics=("parallel", "arbitrary"),
                vmem_limit_bytes=int(vmem_limit),
            ),
            cost_estimate=cost,
        )(x2d, w1p, b1p, w2p, b2p)

    return out2d[:rows, :Dout].reshape(*lead, Dout)


def reference_mlp(x, w1, b1, w2, b2):
    h = jnp.einsum("...d,dh->...h", x, w1) + b1
    h = 0.5 * h * (1.0 + jax.lax.erf(h / jnp.sqrt(2.0)))
    return jnp.einsum("...h,ho->...o", h, w2) + b2


if __name__ == "__main__":
    # Small shapes consistent with the module (Mlp default: out_features = in).
    B, N = 2, 8
    in_features = 16
    hidden_features = 32
    out_features = in_features

    key = jax.random.PRNGKey(0)
    kx, k1, k2, k3, k4, k5, k6, k7 = jax.random.split(key, 8)

    x = jax.random.normal(kx, (B, N, in_features), dtype=jnp.float32)
    w1 = jax.random.normal(k1, (in_features, hidden_features), jnp.float32) * 0.05
    b1 = jax.random.normal(k2, (hidden_features,), jnp.float32) * 0.01
    w2 = jax.random.normal(k3, (hidden_features, out_features), jnp.float32) * 0.05
    b2 = jax.random.normal(k4, (out_features,), jnp.float32) * 0.01

    ref = reference_mlp(x, w1, b1, w2, b2)

    # 1) f32 compute, exact erf GELU: tight semantics check.
    out_f32 = jax.block_until_ready(
        mlp_forward(x, w1, b1, w2, b2, compute_dtype=jnp.float32))
    assert out_f32.shape == (B, N, out_features)
    assert jnp.allclose(out_f32, ref, atol=1e-5, rtol=1e-5), "f32 mismatch vs reference"

    # 2) default bf16-MXU path (f32 accumulation), exact GELU.
    out_bf16 = jax.block_until_ready(mlp_forward(x, w1, b1, w2, b2))
    assert out_bf16.shape == (B, N, out_features)
    assert jnp.allclose(out_bf16, ref, atol=2e-2, rtol=5e-2), "bf16 mismatch vs reference"

    # 3) fast-GELU path (tanh on the EUP) -- the recommended v6e/v7x setting.
    out_fast = jax.block_until_ready(
        mlp_forward(x, w1, b1, w2, b2, gelu_approximate=True))
    assert jnp.allclose(out_fast, ref, atol=2e-2, rtol=5e-2), "approx-GELU mismatch"

    # 4) H-tiled accumulator path + non-divisible rows: rows=80 (5 row tiles of
    #    16) and hidden=256 forced into 2 H-tiles of 128 -> exercises the
    #    pl.when init/finalize + f32 scratch path used for large H on v7x.
    hf2, of2 = 256, 48
    xb = jax.random.normal(k5, (5, 16, in_features), dtype=jnp.float32)
    w1b = jax.random.normal(k6, (in_features, hf2), jnp.float32) * 0.05
    b1b = jnp.full((hf2,), 0.01, jnp.float32)
    w2b = jax.random.normal(k7, (hf2, of2), jnp.float32) * 0.05
    b2b = jnp.full((of2,), -0.01, jnp.float32)
    out_ht = jax.block_until_ready(
        mlp_forward(xb, w1b, b1b, w2b, b2b, tm=16, th=128,
                    compute_dtype=jnp.float32))
    ref_ht = reference_mlp(xb, w1b, b1b, w2b, b2b)
    assert out_ht.shape == (5, 16, of2)
    assert jnp.allclose(out_ht, ref_ht, atol=1e-4, rtol=1e-4), "H-tiled mismatch"

    print("KERNEL_OK")
</pallas_src>

<mosaic_0001>
module attributes {stable_mosaic.version = 11 : i64} {
  func.func @_mlp_kernel_resident(%arg0: i32, %arg1: memref<16x128xf32, #tpu.memory_space<vmem>>, %arg2: memref<128x128xf32, #tpu.memory_space<vmem>>, %arg3: memref<1x128xf32, #tpu.memory_space<vmem>>, %arg4: memref<128x128xf32, #tpu.memory_space<vmem>>, %arg5: memref<1x128xf32, #tpu.memory_space<vmem>>, %arg6: memref<16x128xf32, #tpu.memory_space<vmem>>) attributes {dimension_semantics = [#tpu.dimension_semantics<parallel>], iteration_bounds = array<i64: 1>, scalar_prefetch = 0 : i64, scratch_operands = 0 : i64, tpu.core_type = #tpu.core_type<tc>, window_params = [{transform_indices = @transform_0, window_bounds = array<i64: 16, 128>}, {pipeline_mode = #tpu.pipeline_mode<synchronous>, transform_indices = @transform_1, window_bounds = array<i64: 128, 128>}, {pipeline_mode = #tpu.pipeline_mode<synchronous>, transform_indices = @transform_2, window_bounds = array<i64: 1, 128>}, {pipeline_mode = #tpu.pipeline_mode<synchronous>, transform_indices = @transform_3, window_bounds = array<i64: 128, 128>}, {pipeline_mode = #tpu.pipeline_mode<synchronous>, transform_indices = @transform_4, window_bounds = array<i64: 1, 128>}, {transform_indices = @transform_5, window_bounds = array<i64: 16, 128>}]} {
    %c0 = arith.constant 0 : index
    %c0_0 = arith.constant 0 : index
    %0 = vector.load %arg1[%c0, %c0_0] : memref<16x128xf32, #tpu.memory_space<vmem>>, vector<16x128xf32>
    %c0_1 = arith.constant 0 : index
    %c0_2 = arith.constant 0 : index
    %1 = vector.load %arg2[%c0_1, %c0_2] : memref<128x128xf32, #tpu.memory_space<vmem>>, vector<128x128xf32>
    %cst = arith.constant dense<0.000000e+00> : vector<16x128xf32>
    %2 = tpu.matmul %0, %1, %cst {dimension_numbers = #tpu.dot_dimension_numbers<[1], [0], [0], [1], [0, 0, 1, 1], [], []>} : vector<16x128xf32>, vector<128x128xf32>, vector<16x128xf32> -> vector<16x128xf32>
    %c0_3 = arith.constant 0 : index
    %c0_4 = arith.constant 0 : index
    %3 = vector.load %arg3[%c0_3, %c0_4] : memref<1x128xf32, #tpu.memory_space<vmem>>, vector<1x128xf32>
    %4 = vector.broadcast %3 : vector<1x128xf32> to vector<16x128xf32>
    %5 = arith.addf %2, %4 : vector<16x128xf32>
    %cst_5 = arith.constant 5.000000e-01 : f32
    %6 = vector.broadcast %cst_5 : f32 to vector<16x128xf32>
    %7 = arith.mulf %6, %5 : vector<16x128xf32>
    %cst_6 = arith.constant 0.707106769 : f32
    %8 = vector.broadcast %cst_6 : f32 to vector<16x128xf32>
    %9 = arith.mulf %5, %8 : vector<16x128xf32>
    %10 = math.erf %9 : vector<16x128xf32>
    %cst_7 = arith.constant 1.000000e+00 : f32
    %11 = vector.broadcast %cst_7 : f32 to vector<16x128xf32>
    %12 = arith.addf %11, %10 : vector<16x128xf32>
    %13 = arith.mulf %7, %12 : vector<16x128xf32>
    %c0_8 = arith.constant 0 : index
    %c0_9 = arith.constant 0 : index
    %14 = vector.load %arg4[%c0_8, %c0_9] : memref<128x128xf32, #tpu.memory_space<vmem>>, vector<128x128xf32>
    %cst_10 = arith.constant dense<0.000000e+00> : vector<16x128xf32>
    %15 = tpu.matmul %13, %14, %cst_10 {dimension_numbers = #tpu.dot_dimension_numbers<[1], [0], [0], [1], [0, 0, 1, 1], [], []>} : vector<16x128xf32>, vector<128x128xf32>, vector<16x128xf32> -> vector<16x128xf32>
    %c0_11 = arith.constant 0 : index
    %c0_12 = arith.constant 0 : index
    %16 = vector.load %arg5[%c0_11, %c0_12] : memref<1x128xf32, #tpu.memory_space<vmem>>, vector<1x128xf32>
    %17 = vector.broadcast %16 : vector<1x128xf32> to vector<16x128xf32>
    %18 = arith.addf %15, %17 : vector<16x128xf32>
    %c0_13 = arith.constant 0 : index
    %c0_14 = arith.constant 0 : index
    %19 = vector.load %arg6[%c0_13, %c0_14] : memref<16x128xf32, #tpu.memory_space<vmem>>, vector<16x128xf32>
    tpu.vector_store %arg6[%c0_13, %c0_14], %18 {strides = array<i32>} : memref<16x128xf32, #tpu.memory_space<vmem>>, vector<16x128xf32>,
    return
  }
  func.func @transform_0(%arg0: i32) -> (i32, i32) {
    %c0_i32 = arith.constant 0 : i32
    %c0_i32_0 = arith.constant 0 : i32
    return %arg0, %c0_i32 : i32, i32
  }
  func.func @transform_1(%arg0: i32) -> (i32, i32) {
    %c0_i32 = arith.constant 0 : i32
    %c0_i32_0 = arith.constant 0 : i32
    %c0_i32_1 = arith.constant 0 : i32
    return %c0_i32, %c0_i32_0 : i32, i32
  }
  func.func @transform_2(%arg0: i32) -> (i32, i32) {
    %c0_i32 = arith.constant 0 : i32
    %c0_i32_0 = arith.constant 0 : i32
    %c0_i32_1 = arith.constant 0 : i32
    return %c0_i32, %c0_i32_0 : i32, i32
  }
  func.func @transform_3(%arg0: i32) -> (i32, i32) {
    %c0_i32 = arith.constant 0 : i32
    %c0_i32_0 = arith.constant 0 : i32
    %c0_i32_1 = arith.constant 0 : i32
    return %c0_i32, %c0_i32_0 : i32, i32
  }
  func.func @transform_4(%arg0: i32) -> (i32, i32) {
    %c0_i32 = arith.constant 0 : i32
    %c0_i32_0 = arith.constant 0 : i32
    %c0_i32_1 = arith.constant 0 : i32
    return %c0_i32, %c0_i32_0 : i32, i32
  }
  func.func @transform_5(%arg0: i32) -> (i32, i32) {
    %c0_i32 = arith.constant 0 : i32
    %c0_i32_0 = arith.constant 0 : i32
    return %arg0, %c0_i32 : i32, i32
  }
}

module attributes {stable_mosaic.version = 11 : i64} {
  func.func @_mlp_kernel_resident(%arg0: i32, %arg1: memref<16x128xf32, #tpu.memory_space<vmem>>, %arg2: memref<128x128xf32, #tpu.memory_space<vmem>>, %arg3: memref<1x128xf32, #tpu.memory_space<vmem>>, %arg4: memref<128x128xf32, #tpu.memory_space<vmem>>, %arg5: memref<1x128xf32, #tpu.memory_space<vmem>>, %arg6: memref<16x128xf32, #tpu.memory_space<vmem>>) attributes {dimension_semantics = [#tpu.dimension_semantics<parallel>], iteration_bounds = array<i64: 1>, scalar_prefetch = 0 : i64, scratch_operands = 0 : i64, tpu.core_type = #tpu.core_type<tc>, window_params = [{transform_indices = @transform_0, window_bounds = array<i64: 16, 128>}, {pipeline_mode = #tpu.pipeline_mode<synchronous>, transform_indices = @transform_1, window_bounds = array<i64: 128, 128>}, {pipeline_mode = #tpu.pipeline_mode<synchronous>, transform_indices = @transform_2, window_bounds = array<i64: 1, 128>}, {pipeline_mode = #tpu.pipeline_mode<synchronous>, transform_indices = @transform_3, window_bounds = array<i64: 128, 128>}, {pipeline_mode = #tpu.pipeline_mode<synchronous>, transform_indices = @transform_4, window_bounds = array<i64: 1, 128>}, {transform_indices = @transform_5, window_bounds = array<i64: 16, 128>}]} {
    %c0 = arith.constant 0 : index
    %c0_0 = arith.constant 0 : index
    %0 = vector.load %arg1[%c0, %c0_0] : memref<16x128xf32, #tpu.memory_space<vmem>>, vector<16x128xf32>
    %c0_1 = arith.constant 0 : index
    %c0_2 = arith.constant 0 : index
    %1 = vector.load %arg2[%c0_1, %c0_2] : memref<128x128xf32, #tpu.memory_space<vmem>>, vector<128x128xf32>
    %cst = arith.constant dense<0.000000e+00> : vector<16x128xf32>
    %2 = tpu.matmul %0, %1, %cst {dimension_numbers = #tpu.dot_dimension_numbers<[1], [0], [0], [1], [0, 0, 1, 1], [], []>} : vector<16x128xf32>, vector<128x128xf32>, vector<16x128xf32> -> vector<16x128xf32>
    %c0_3 = arith.constant 0 : index
    %c0_4 = arith.constant 0 : index
    %3 = vector.load %arg3[%c0_3, %c0_4] : memref<1x128xf32, #tpu.memory_space<vmem>>, vector<1x128xf32>
    %4 = vector.broadcast %3 : vector<1x128xf32> to vector<16x128xf32>
    %5 = arith.addf %2, %4 : vector<16x128xf32>
    %cst_5 = arith.constant 5.000000e-01 : f32
    %6 = vector.broadcast %cst_5 : f32 to vector<16x128xf32>
    %7 = arith.mulf %6, %5 : vector<16x128xf32>
    %cst_6 = arith.constant 0.707106769 : f32
    %8 = vector.broadcast %cst_6 : f32 to vector<16x128xf32>
    %9 = arith.mulf %5, %8 : vector<16x128xf32>
    %10 = math.erf %9 : vector<16x128xf32>
    %cst_7 = arith.constant 1.000000e+00 : f32
    %11 = vector.broadcast %cst_7 : f32 to vector<16x128xf32>
    %12 = arith.addf %11, %10 : vector<16x128xf32>
    %13 = arith.mulf %7, %12 : vector<16x128xf32>
    %c0_8 = arith.constant 0 : index
    %c0_9 = arith.constant 0 : index
    %14 = vector.load %arg4[%c0_8, %c0_9] : memref<128x128xf32, #tpu.memory_space<vmem>>, vector<128x128xf32>
    %cst_10 = arith.constant dense<0.000000e+00> : vector<16x128xf32>
    %15 = tpu.matmul %13, %14, %cst_10 {dimension_numbers = #tpu.dot_dimension_numbers<[1], [0], [0], [1], [0, 0, 1, 1], [], []>} : vector<16x128xf32>, vector<128x128xf32>, vector<16x128xf32> -> vector<16x128xf32>
    %c0_11 = arith.constant 0 : index
    %c0_12 = arith.constant 0 : index
    %16 = vector.load %arg5[%c0_11, %c0_12] : memref<1x128xf32, #tpu.memory_space<vmem>>, vector<1x128xf32>
    %17 = vector.broadcast %16 : vector<1x128xf32> to vector<16x128xf32>
    %18 = arith.addf %15, %17 : vector<16x128xf32>
    %c0_13 = arith.constant 0 : index
    %c0_14 = arith.constant 0 : index
    %19 = vector.load %arg6[%c0_13, %c0_14] : memref<16x128xf32, #tpu.memory_space<vmem>>, vector<16x128xf32>
    tpu.vector_store %arg6[%c0_13, %c0_14], %18 {strides = array<i32>} : memref<16x128xf32, #tpu.memory_space<vmem>>, vector<16x128xf32>,
    return
  }
  func.func @transform_0(%arg0: i32) -> (i32, i32) {
    %c0_i32 = arith.constant 0 : i32
    %c0_i32_0 = arith.constant 0 : i32
    return %arg0, %c0_i32 : i32, i32
  }
  func.func @transform_1(%arg0: i32) -> (i32, i32) {
    %c0_i32 = arith.constant 0 : i32
    %c0_i32_0 = arith.constant 0 : i32
    %c0_i32_1 = arith.constant 0 : i32
    return %c0_i32, %c0_i32_0 : i32, i32
  }
  func.func @transform_2(%arg0: i32) -> (i32, i32) {
    %c0_i32 = arith.constant 0 : i32
    %c0_i32_0 = arith.constant 0 : i32
    %c0_i32_1 = arith.constant 0 : i32
    return %c0_i32, %c0_i32_0 : i32, i32
  }
  func.func @transform_3(%arg0: i32) -> (i32, i32) {
    %c0_i32 = arith.constant 0 : i32
    %c0_i32_0 = arith.constant 0 : i32
    %c0_i32_1 = arith.constant 0 : i32
    return %c0_i32, %c0_i32_0 : i32, i32
  }
  func.func @transform_4(%arg0: i32) -> (i32, i32) {
    %c0_i32 = arith.constant 0 : i32
    %c0_i32_0 = arith.constant 0 : i32
    %c0_i32_1 = arith.constant 0 : i32
    return %c0_i32, %c0_i32_0 : i32, i32
  }
  func.func @transform_5(%arg0: i32) -> (i32, i32) {
    %c0_i32 = arith.constant 0 : i32
    %c0_i32_0 = arith.constant 0 : i32
    return %arg0, %c0_i32 : i32, i32
  }
}

</mosaic_0001>

<llo_original>
// kernel: tpu_custom_call.1
$region0: #{tpu_custom_call.1}
  #allocation0 [shape = 'u32[]', space=smem, size = 0x4, offset = 0x4, fixed_abs, tag = 'smem constant byte address 0x4 - core index']
  #allocation1 [shape = 'u32[144,128]{1,0:T(1,128)}', space=vmem, size = 0x12000, scoped, tag = 'internal scratch']
  %s0 = inlined_call_operand.hbm [shape: f32[16,128], index: 0, kind: input, shape index: {}]
  %s1 = inlined_call_operand.hbm [shape: f32[128,128], index: 1, kind: input, shape index: {}]
  %s2 = inlined_call_operand.vmem [shape: f32[1,128], index: 2, kind: input, shape index: {}]
  %s3 = inlined_call_operand.hbm [shape: f32[128,128], index: 3, kind: input, shape index: {}]
  %s4 = inlined_call_operand.vmem [shape: f32[1,128], index: 4, kind: input, shape index: {}]
  %s5 = inlined_call_operand.hbm [shape: f32[16,128], index: 5, kind: output, shape index: {}]
  %s6 = sld [smem:[#allocation0]]
  $region42: #{tpu_custom_call.1} parent=0
    _
  %s8 = ssub.s32 1, %s6
  %s9 = scalar_select 0, %s8, %s6
  $region1: #{tpu_custom_call.1} parent=0
    #allocation2 [shape = 'u8[8192]{0}', space=vmem, size = 0x2000, scoped, tag = 'input window, operand 0, single buffered']
    #allocation3 [shape = 's32[1]{0}', space=sflag, size = 0x4, scoped, tag = 'scoped memory for tpu_custom_call.1']
    #allocation4 [shape = 's32[1]{0}', space=sflag, size = 0x4, scoped, tag = 'scoped memory for tpu_custom_call.1']
    #allocation5 [shape = 'u8[65536]{0}', space=vmem, size = 0x10000, scoped, tag = 'input window, operand 1, single buffered']
    #allocation6 [shape = 's32[1]{0}', space=sflag, size = 0x4, scoped, tag = 'scoped memory for tpu_custom_call.1']
    #allocation7 [shape = 'u8[65536]{0}', space=vmem, size = 0x10000, scoped, tag = 'input window, operand 3, single buffered']
    #allocation8 [shape = 'u8[8192]{0}', space=vmem, size = 0x2000, scoped, tag = 'output window, operand 0, single buffered']
    %10 = vsyncpa [#allocation3], 0
    %11 = vsyncpa [#allocation6], 0
    %12 = vsyncpa [#allocation4], 0
    // Predicated region
    $region2: #{tpu_custom_call.1} parent=1 // pred_check
      _
    $region3: #{tpu_custom_call.1} parent=1 // pred_check_branch
      %14 = sbr.rel (0) target = $region5
    $region4: #{tpu_custom_call.1} parent=1 // pred_region
      %s16 = ssub.s32 256, 256
      %17 = vsyncadd [#allocation3], %s16
      %s18 = sshll.u32 [#allocation2], 4
      %s19 = int_to_ptr.vmem [resolvable:$true] %s18
      %24 = dma.hbm_to_vmem [thread:$0]  %s0, 256, %s19, [#allocation3], 128, 128, 8
    $region5: #{tpu_custom_call.1} parent=1 // pred_fallthru
      _
    // Predicated region
    $region6: #{tpu_custom_call.1} parent=1 // pred_check
      _
    $region7: #{tpu_custom_call.1} parent=1 // pred_check_branch
      %26 = sbr.rel (0) target = $region9
    $region8: #{tpu_custom_call.1} parent=1 // pred_region
      %s28 = ssub.s32 2048, 2048
      %29 = vsyncadd [#allocation6], %s28
      %s30 = sshll.u32 [#allocation5], 4
      %s31 = int_to_ptr.vmem [resolvable:$true] %s30
      %36 = dma.hbm_to_vmem [thread:$0]  %s1, 2048, %s31, [#allocation6], 128, 128, 8
    $region9: #{tpu_custom_call.1} parent=1 // pred_fallthru
      _
    // Predicated region
    $region10: #{tpu_custom_call.1} parent=1 // pred_check
      _
    $region11: #{tpu_custom_call.1} parent=1 // pred_check_branch
      %38 = sbr.rel (0) target = $region13
    $region12: #{tpu_custom_call.1} parent=1 // pred_region
      _
    $region13: #{tpu_custom_call.1} parent=1 // pred_fallthru
      _
    // Predicated region
    $region14: #{tpu_custom_call.1} parent=1 // pred_check
      _
    $region15: #{tpu_custom_call.1} parent=1 // pred_check_branch
      %40 = sbr.rel (0) target = $region17
    $region16: #{tpu_custom_call.1} parent=1 // pred_region
      %s42 = ssub.s32 2048, 2048
      %43 = vsyncadd [#allocation6], %s42
      %s44 = sshll.u32 [#allocation7], 4
      %s45 = int_to_ptr.vmem [resolvable:$true] %s44
      %50 = dma.hbm_to_vmem [thread:$0]  %s3, 2048, %s45, [#allocation6], 128, 128, 8
    $region17: #{tpu_custom_call.1} parent=1 // pred_fallthru
      _
    // Predicated region
    $region18: #{tpu_custom_call.1} parent=1 // pred_check
      _
    $region19: #{tpu_custom_call.1} parent=1 // pred_check_branch
      %52 = sbr.rel (0) target = $region21
    $region20: #{tpu_custom_call.1} parent=1 // pred_region
      _
    $region21: #{tpu_custom_call.1} parent=1 // pred_fallthru
      _
    // Predicated region
    $region22: #{tpu_custom_call.1} parent=1 // pred_check
      _
    $region23: #{tpu_custom_call.1} parent=1 // pred_check_branch
      %54 = sbr.rel (0) target = $region25
    $region24: #{tpu_custom_call.1} parent=1 // pred_region
      %55 = dma.done [#allocation3], 256
    $region25: #{tpu_custom_call.1} parent=1 // pred_fallthru
      _
    // Predicated region
    $region26: #{tpu_custom_call.1} parent=1 // pred_check
      _
    $region27: #{tpu_custom_call.1} parent=1 // pred_check_branch
      %57 = sbr.rel (0) target = $region29
    $region28: #{tpu_custom_call.1} parent=1 // pred_region
      %58 = dma.done [#allocation6], 2048
    $region29: #{tpu_custom_call.1} parent=1 // pred_fallthru
      _
    // Predicated region
    $region30: #{tpu_custom_call.1} parent=1 // pred_check
      _
    $region31: #{tpu_custom_call.1} parent=1 // pred_check_branch
      %60 = sbr.rel (0) target = $region33
    $region32: #{tpu_custom_call.1} parent=1 // pred_region
      %61 = dma.done [#allocation6], 2048
    $region33: #{tpu_custom_call.1} parent=1 // pred_fallthru
      _
    %v62 = vld [vmem:[#allocation2] sm:$0xff]
    %v63 = vld [vmem:[#allocation2 + $0x8] sm:$0xff]
    %v64 = vld [vmem:[#allocation5] sm:$0xff]
    %v65 = vld [vmem:[#allocation5 + $0x8] sm:$0xff]
    %v66 = vld [vmem:[#allocation5 + $0x10] sm:$0xff]
    %v67 = vld [vmem:[#allocation5 + $0x18] sm:$0xff]
    %v68 = vld [vmem:[#allocation5 + $0x20] sm:$0xff]
    %v69 = vld [vmem:[#allocation5 + $0x28] sm:$0xff]
    %v70 = vld [vmem:[#allocation5 + $0x30] sm:$0xff]
    %v71 = vld [vmem:[#allocation5 + $0x38] sm:$0xff]
    %v72 = vld [vmem:[#allocation5 + $0x40] sm:$0xff]
    %v73 = vld [vmem:[#allocation5 + $0x48] sm:$0xff]
    %v74 = vld [vmem:[#allocation5 + $0x50] sm:$0xff]
    %v75 = vld [vmem:[#allocation5 + $0x58] sm:$0xff]
    %v76 = vld [vmem:[#allocation5 + $0x60] sm:$0xff]
    %v77 = vld [vmem:[#allocation5 + $0x68] sm:$0xff]
    %v78 = vld [vmem:[#allocation5 + $0x70] sm:$0xff]
    %v79 = vld [vmem:[#allocation5 + $0x78] sm:$0xff]
    %v80 = vld [vmem:[%s2] sm:$0x1]
    %v82 = vlaneseq
    %v83 = vshrl.u32 %v82, 7
    %v84 = vsub.s32 0, %v83
    %v85 = vrot.slane %v80, %v84
    %87 = vmatprep.subr.mxu0 0.0
    %88 = vmatpush1.msra.mxu0 %v64
    %89 = vmatprep.subr.mxu0 0.0
    %90 = vmatpush1.msra.mxu0 %v65
    %91 = vmatprep.subr.mxu0 0.0
    %92 = vmatpush1.msra.mxu0 %v66
    %93 = vmatprep.subr.mxu0 0.0
    %94 = vmatpush1.msra.mxu0 %v67
    %95 = vmatprep.subr.mxu0 0.0
    %96 = vmatpush1.msra.mxu0 %v68
    %97 = vmatprep.subr.mxu0 0.0
    %98 = vmatpush1.msra.mxu0 %v69
    %99 = vmatprep.subr.mxu0 0.0
    %100 = vmatpush1.msra.mxu0 %v70
    %101 = vmatprep.subr.mxu0 0.0
    %102 = vmatpush1.msra.mxu0 %v71
    %103 = vmatprep.subr.mxu0 0.0
    %104 = vmatpush1.msra.mxu0 %v72
    %105 = vmatprep.subr.mxu0 0.0
    %106 = vmatpush1.msra.mxu0 %v73
    %107 = vmatprep.subr.mxu0 0.0
    %108 = vmatpush1.msra.mxu0 %v74
    %109 = vmatprep.subr.mxu0 0.0
    %110 = vmatpush1.msra.mxu0 %v75
    %111 = vmatprep.subr.mxu0 0.0
    %112 = vmatpush1.msra.mxu0 %v76
    %113 = vmatprep.subr.mxu0 0.0
    %114 = vmatpush1.msra.mxu0 %v77
    %115 = vmatprep.subr.mxu0 0.0
    %116 = vmatpush1.msra.mxu0 %v78
    %117 = vmatprep.subr.mxu0 0.0
    %118 = vmatpush1.msra.mxu0 %v79
    %119 = vmatprep.subr.mxu0 0.0
    %120 = vmatpush1.msra.mxu0 0.0
    %121 = vmatprep.subr.mxu0 0.0
    %122 = vmatpush1.msra.mxu0 0.0
    %123 = vmatprep.subr.mxu0 0.0
    %124 = vmatpush1.msra.mxu0 0.0
    %125 = vmatprep.subr.mxu0 0.0
    %126 = vmatpush1.msra.mxu0 0.0
    %127 = vmatprep.subr.mxu0 0.0
    %128 = vmatpush1.msra.mxu0 0.0
    %129 = vmatprep.subr.mxu0 0.0
    %130 = vmatpush1.msra.mxu0 0.0
    %131 = vmatprep.subr.mxu0 0.0
    %132 = vmatpush1.msra.mxu0 0.0
    %133 = vmatprep.subr.mxu0 0.0
    %134 = vmatpush1.msra.mxu0 0.0
    %135 = vmatprep.subr.mxu0 0.0
    %136 = vmatpush1.msra.mxu0 0.0
    %137 = vmatprep.subr.mxu0 0.0
    %138 = vmatpush1.msra.mxu0 0.0
    %139 = vmatprep.subr.mxu0 0.0
    %140 = vmatpush1.msra.mxu0 0.0
    %141 = vmatprep.subr.mxu0 0.0
    %142 = vmatpush1.msra.mxu0 0.0
    %143 = vmatprep.subr.mxu0 0.0
    %144 = vmatpush1.msra.mxu0 0.0
    %145 = vmatprep.subr.mxu0 0.0
    %146 = vmatpush1.msra.mxu0 0.0
    %147 = vmatprep.subr.mxu0 0.0
    %148 = vmatpush1.msra.mxu0 0.0
    %149 = vmatprep.subr.mxu0 0.0
    %150 = vmatpush1.msra.mxu0 0.0
    %151 = vmatprep.mubr.f32.mxu0 0.0
    %152 = vmatmul.mubr.f32.gmra.mrb[0].mxu0 %v62
    %v153 = vpop.f32.mrb[0].mxu0
    %v154 = vadd.f32 %v85, %v153
    %v155 = vpop.f32.mrb[0].mxu0
    %156 = vmatprep.mubr.f32.mxu0 0.0
    %157 = vmatmul.mubr.f32.gmra.mrb[0].mxu0 %v63
    %v158 = vpop.f32.mrb[0].mxu0
    %v159 = vadd.f32 %v85, %v158
    %v160 = vpop.f32.mrb[0].mxu0
    %161 = vdwg.mxu0
    %v162 = vmul.f32 %v154, 0.5
    %v163 = vmul.f32 %v159, 0.5
    %v164 = vmul.f32 %v154, 0.70710677
    %v165 = vmul.f32 %v159, 0.70710677
    %v166 = verf.f32.pop %v164
    %v167 = verf.f32.pop %v165
    %v168 = vadd.f32 %v166, 1.0
    %v169 = vadd.f32 %v167, 1.0
    %v170 = vmul.f32 %v162, %v168
    %v171 = vmul.f32 %v163, %v169
    %v172 = vld [vmem:[#allocation7] sm:$0xff]
    %v173 = vld [vmem:[#allocation7 + $0x8] sm:$0xff]
    %v174 = vld [vmem:[#allocation7 + $0x10] sm:$0xff]
    %v175 = vld [vmem:[#allocation7 + $0x18] sm:$0xff]
    %v176 = vld [vmem:[#allocation7 + $0x20] sm:$0xff]
    %v177 = vld [vmem:[#allocation7 + $0x28] sm:$0xff]
    %v178 = vld [vmem:[#allocation7 + $0x30] sm:$0xff]
    %v179 = vld [vmem:[#allocation7 + $0x38] sm:$0xff]
    %v180 = vld [vmem:[#allocation7 + $0x40] sm:$0xff]
    %v181 = vld [vmem:[#allocation7 + $0x48] sm:$0xff]
    %v182 = vld [vmem:[#allocation7 + $0x50] sm:$0xff]
    %v183 = vld [vmem:[#allocation7 + $0x58] sm:$0xff]
    %v184 = vld [vmem:[#allocation7 + $0x60] sm:$0xff]
    %v185 = vld [vmem:[#allocation7 + $0x68] sm:$0xff]
    %v186 = vld [vmem:[#allocation7 + $0x70] sm:$0xff]
    %v187 = vld [vmem:[#allocation7 + $0x78] sm:$0xff]
    %v188 = vld [vmem:[%s4] sm:$0x1]
    %v190 = vlaneseq
    %v191 = vshrl.u32 %v190, 7
    %v192 = vsub.s32 0, %v191
    %v193 = vrot.slane %v188, %v192
    %195 = vmatprep.subr.mxu0 0.0
    %196 = vmatpush1.msra.mxu0 %v172
    %197 = vmatprep.subr.mxu0 0.0
    %198 = vmatpush1.msra.mxu0 %v173
    %199 = vmatprep.subr.mxu0 0.0
    %200 = vmatpush1.msra.mxu0 %v174
    %201 = vmatprep.subr.mxu0 0.0
    %202 = vmatpush1.msra.mxu0 %v175
    %203 = vmatprep.subr.mxu0 0.0
    %204 = vmatpush1.msra.mxu0 %v176
    %205 = vmatprep.subr.mxu0 0.0
    %206 = vmatpush1.msra.mxu0 %v177
    %207 = vmatprep.subr.mxu0 0.0
    %208 = vmatpush1.msra.mxu0 %v178
    %209 = vmatprep.subr.mxu0 0.0
    %210 = vmatpush1.msra.mxu0 %v179
    %211 = vmatprep.subr.mxu0 0.0
    %212 = vmatpush1.msra.mxu0 %v180
    %213 = vmatprep.subr.mxu0 0.0
    %214 = vmatpush1.msra.mxu0 %v181
    %215 = vmatprep.subr.mxu0 0.0
    %216 = vmatpush1.msra.mxu0 %v182
    %217 = vmatprep.subr.mxu0 0.0
    %218 = vmatpush1.msra.mxu0 %v183
    %219 = vmatprep.subr.mxu0 0.0
    %220 = vmatpush1.msra.mxu0 %v184
    %221 = vmatprep.subr.mxu0 0.0
    %222 = vmatpush1.msra.mxu0 %v185
    %223 = vmatprep.subr.mxu0 0.0
    %224 = vmatpush1.msra.mxu0 %v186
    %225 = vmatprep.subr.mxu0 0.0
    %226 = vmatpush1.msra.mxu0 %v187
    %227 = vmatprep.subr.mxu0 0.0
    %228 = vmatpush1.msra.mxu0 0.0
    %229 = vmatprep.subr.mxu0 0.0
    %230 = vmatpush1.msra.mxu0 0.0
    %231 = vmatprep.subr.mxu0 0.0
    %232 = vmatpush1.msra.mxu0 0.0
    %233 = vmatprep.subr.mxu0 0.0
    %234 = vmatpush1.msra.mxu0 0.0
    %235 = vmatprep.subr.mxu0 0.0
    %236 = vmatpush1.msra.mxu0 0.0
    %237 = vmatprep.subr.mxu0 0.0
    %238 = vmatpush1.msra.mxu0 0.0
    %239 = vmatprep.subr.mxu0 0.0
    %240 = vmatpush1.msra.mxu0 0.0
    %241 = vmatprep.subr.mxu0 0.0
    %242 = vmatpush1.msra.mxu0 0.0
    %243 = vmatprep.subr.mxu0 0.0
    %244 = vmatpush1.msra.mxu0 0.0
    %245 = vmatprep.subr.mxu0 0.0
    %246 = vmatpush1.msra.mxu0 0.0
    %247 = vmatprep.subr.mxu0 0.0
    %248 = vmatpush1.msra.mxu0 0.0
    %249 = vmatprep.subr.mxu0 0.0
    %250 = vmatpush1.msra.mxu0 0.0
    %251 = vmatprep.subr.mxu0 0.0
    %252 = vmatpush1.msra.mxu0 0.0
    %253 = vmatprep.subr.mxu0 0.0
    %254 = vmatpush1.msra.mxu0 0.0
    %255 = vmatprep.subr.mxu0 0.0
    %256 = vmatpush1.msra.mxu0 0.0
    %257 = vmatprep.subr.mxu0 0.0
    %258 = vmatpush1.msra.mxu0 0.0
    %259 = vmatprep.mubr.f32.mxu0 0.0
    %260 = vmatmul.mubr.f32.gmra.mrb[0].mxu0 %v170
    %v261 = vpop.f32.mrb[0].mxu0
    %v262 = vadd.f32 %v193, %v261
    %v263 = vpop.f32.mrb[0].mxu0
    %264 = vmatprep.mubr.f32.mxu0 0.0
    %265 = vmatmul.mubr.f32.gmra.mrb[0].mxu0 %v171
    %v266 = vpop.f32.mrb[0].mxu0
    %v267 = vadd.f32 %v193, %v266
    %v268 = vpop.f32.mrb[0].mxu0
    %269 = vdwg.mxu0
    %270 = vst [vmem:[#allocation8] sm:$0xff] %v262
    %271 = vst [vmem:[#allocation8 + $0x8] sm:$0xff] %v267
    // Predicated region
    $region34: #{tpu_custom_call.1} parent=1 // pred_check
      _
    $region35: #{tpu_custom_call.1} parent=1 // pred_check_branch
      %273 = sbr.rel (0) target = $region37
    $region36: #{tpu_custom_call.1} parent=1 // pred_region
      %s275 = ssub.s32 256, 256
      %276 = vsyncadd [#allocation4], %s275
      %s277 = sshll.u32 [#allocation8], 4
      %s278 = int_to_ptr.vmem [resolvable:$true] %s277
      %283 = dma.vmem_to_hbm [thread:$0]  %s278, 256, %s5, [#allocation4], 128, 128, 8
    $region37: #{tpu_custom_call.1} parent=1 // pred_fallthru
      _
    // Predicated region
    $region38: #{tpu_custom_call.1} parent=1 // pred_check
      _
    $region39: #{tpu_custom_call.1} parent=1 // pred_check_branch
      %285 = sbr.rel (0) target = $region41
    $region40: #{tpu_custom_call.1} parent=1 // pred_region
      %286 = dma.done [#allocation4], 256
    $region41: #{tpu_custom_call.1} parent=1 // pred_fallthru
      _
    %287 = vsyncpa [#allocation3], 1
    %288 = vsyncpa [#allocation6], 1
    %289 = vsyncpa [#allocation4], 1

// kernel: tpu_custom_call.1
$region0: #{tpu_custom_call.1}
  #allocation0 [shape = 'u32[]', space=smem, size = 0x4, offset = 0x4, fixed_abs, tag = 'smem constant byte address 0x4 - core index']
  #allocation1 [shape = 'u32[144,128]{1,0:T(1,128)}', space=vmem, size = 0x12000, scoped, tag = 'internal scratch']
  %s0 = inlined_call_operand.hbm [shape: f32[16,128], index: 0, kind: input, shape index: {}]
  %s1 = inlined_call_operand.hbm [shape: f32[128,128], index: 1, kind: input, shape index: {}]
  %s2 = inlined_call_operand.vmem [shape: f32[1,128], index: 2, kind: input, shape index: {}]
  %s3 = inlined_call_operand.hbm [shape: f32[128,128], index: 3, kind: input, shape index: {}]
  %s4 = inlined_call_operand.vmem [shape: f32[1,128], index: 4, kind: input, shape index: {}]
  %s5 = inlined_call_operand.hbm [shape: f32[16,128], index: 5, kind: output, shape index: {}]
  %s6 = sld [smem:[#allocation0]]
  $region42: #{tpu_custom_call.1} parent=0
    _
  %s8 = ssub.s32 1, %s6
  %s9 = scalar_select 0, %s8, %s6
  $region1: #{tpu_custom_call.1} parent=0
    #allocation2 [shape = 'u8[8192]{0}', space=vmem, size = 0x2000, scoped, tag = 'input window, operand 0, single buffered']
    #allocation3 [shape = 's32[1]{0}', space=sflag, size = 0x4, scoped, tag = 'scoped memory for tpu_custom_call.1']
    #allocation4 [shape = 's32[1]{0}', space=sflag, size = 0x4, scoped, tag = 'scoped memory for tpu_custom_call.1']
    #allocation5 [shape = 'u8[65536]{0}', space=vmem, size = 0x10000, scoped, tag = 'input window, operand 1, single buffered']
    #allocation6 [shape = 's32[1]{0}', space=sflag, size = 0x4, scoped, tag = 'scoped memory for tpu_custom_call.1']
    #allocation7 [shape = 'u8[65536]{0}', space=vmem, size = 0x10000, scoped, tag = 'input window, operand 3, single buffered']
    #allocation8 [shape = 'u8[8192]{0}', space=vmem, size = 0x2000, scoped, tag = 'output window, operand 0, single buffered']
    %10 = vsyncpa [#allocation3], 0
    %11 = vsyncpa [#allocation6], 0
    %12 = vsyncpa [#allocation4], 0
    // Predicated region
    $region2: #{tpu_custom_call.1} parent=1 // pred_check
      _
    $region3: #{tpu_custom_call.1} parent=1 // pred_check_branch
      %14 = sbr.rel (0) target = $region5
    $region4: #{tpu_custom_call.1} parent=1 // pred_region
      %s16 = ssub.s32 256, 256
      %17 = vsyncadd [#allocation3], %s16
      %s18 = sshll.u32 [#allocation2], 4
      %s19 = int_to_ptr.vmem [resolvable:$true] %s18
      %24 = dma.hbm_to_vmem [thread:$0]  %s0, 256, %s19, [#allocation3], 128, 128, 8
    $region5: #{tpu_custom_call.1} parent=1 // pred_fallthru
      _
    // Predicated region
    $region6: #{tpu_custom_call.1} parent=1 // pred_check
      _
    $region7: #{tpu_custom_call.1} parent=1 // pred_check_branch
      %26 = sbr.rel (0) target = $region9
    $region8: #{tpu_custom_call.1} parent=1 // pred_region
      %s28 = ssub.s32 2048, 2048
      %29 = vsyncadd [#allocation6], %s28
      %s30 = sshll.u32 [#allocation5], 4
      %s31 = int_to_ptr.vmem [resolvable:$true] %s30
      %36 = dma.hbm_to_vmem [thread:$0]  %s1, 2048, %s31, [#allocation6], 128, 128, 8
    $region9: #{tpu_custom_call.1} parent=1 // pred_fallthru
      _
    // Predicated region
    $region10: #{tpu_custom_call.1} parent=1 // pred_check
      _
    $region11: #{tpu_custom_call.1} parent=1 // pred_check_branch
      %38 = sbr.rel (0) target = $region13
    $region12: #{tpu_custom_call.1} parent=1 // pred_region
      _
    $region13: #{tpu_custom_call.1} parent=1 // pred_fallthru
      _
    // Predicated region
    $region14: #{tpu_custom_call.1} parent=1 // pred_check
      _
    $region15: #{tpu_custom_call.1} parent=1 // pred_check_branch
      %40 = sbr.rel (0) target = $region17
    $region16: #{tpu_custom_call.1} parent=1 // pred_region
      %s42 = ssub.s32 2048, 2048
      %43 = vsyncadd [#allocation6], %s42
      %s44 = sshll.u32 [#allocation7], 4
      %s45 = int_to_ptr.vmem [resolvable:$true] %s44
      %50 = dma.hbm_to_vmem [thread:$0]  %s3, 2048, %s45, [#allocation6], 128, 128, 8
    $region17: #{tpu_custom_call.1} parent=1 // pred_fallthru
      _
    // Predicated region
    $region18: #{tpu_custom_call.1} parent=1 // pred_check
      _
    $region19: #{tpu_custom_call.1} parent=1 // pred_check_branch
      %52 = sbr.rel (0) target = $region21
    $region20: #{tpu_custom_call.1} parent=1 // pred_region
      _
    $region21: #{tpu_custom_call.1} parent=1 // pred_fallthru
      _
    // Predicated region
    $region22: #{tpu_custom_call.1} parent=1 // pred_check
      _
    $region23: #{tpu_custom_call.1} parent=1 // pred_check_branch
      %54 = sbr.rel (0) target = $region25
    $region24: #{tpu_custom_call.1} parent=1 // pred_region
      %55 = dma.done [#allocation3], 256
    $region25: #{tpu_custom_call.1} parent=1 // pred_fallthru
      _
    // Predicated region
    $region26: #{tpu_custom_call.1} parent=1 // pred_check
      _
    $region27: #{tpu_custom_call.1} parent=1 // pred_check_branch
      %57 = sbr.rel (0) target = $region29
    $region28: #{tpu_custom_call.1} parent=1 // pred_region
      %58 = dma.done [#allocation6], 2048
    $region29: #{tpu_custom_call.1} parent=1 // pred_fallthru
      _
    // Predicated region
    $region30: #{tpu_custom_call.1} parent=1 // pred_check
      _
    $region31: #{tpu_custom_call.1} parent=1 // pred_check_branch
      %60 = sbr.rel (0) target = $region33
    $region32: #{tpu_custom_call.1} parent=1 // pred_region
      %61 = dma.done [#allocation6], 2048
    $region33: #{tpu_custom_call.1} parent=1 // pred_fallthru
      _
    %v62 = vld [vmem:[#allocation2] sm:$0xff]
    %v63 = vld [vmem:[#allocation2 + $0x8] sm:$0xff]
    %v64 = vld [vmem:[#allocation5] sm:$0xff]
    %v65 = vld [vmem:[#allocation5 + $0x8] sm:$0xff]
    %v66 = vld [vmem:[#allocation5 + $0x10] sm:$0xff]
    %v67 = vld [vmem:[#allocation5 + $0x18] sm:$0xff]
    %v68 = vld [vmem:[#allocation5 + $0x20] sm:$0xff]
    %v69 = vld [vmem:[#allocation5 + $0x28] sm:$0xff]
    %v70 = vld [vmem:[#allocation5 + $0x30] sm:$0xff]
    %v71 = vld [vmem:[#allocation5 + $0x38] sm:$0xff]
    %v72 = vld [vmem:[#allocation5 + $0x40] sm:$0xff]
    %v73 = vld [vmem:[#allocation5 + $0x48] sm:$0xff]
    %v74 = vld [vmem:[#allocation5 + $0x50] sm:$0xff]
    %v75 = vld [vmem:[#allocation5 + $0x58] sm:$0xff]
    %v76 = vld [vmem:[#allocation5 + $0x60] sm:$0xff]
    %v77 = vld [vmem:[#allocation5 + $0x68] sm:$0xff]
    %v78 = vld [vmem:[#allocation5 + $0x70] sm:$0xff]
    %v79 = vld [vmem:[#allocation5 + $0x78] sm:$0xff]
    %v80 = vld [vmem:[%s2] sm:$0x1]
    %v82 = vlaneseq
    %v83 = vshrl.u32 %v82, 7
    %v84 = vsub.s32 0, %v83
    %v85 = vrot.slane %v80, %v84
    %87 = vmatprep.subr.mxu0 0.0
    %88 = vmatpush1.msra.mxu0 %v64
    %89 = vmatprep.subr.mxu0 0.0
    %90 = vmatpush1.msra.mxu0 %v65
    %91 = vmatprep.subr.mxu0 0.0
    %92 = vmatpush1.msra.mxu0 %v66
    %93 = vmatprep.subr.mxu0 0.0
    %94 = vmatpush1.msra.mxu0 %v67
    %95 = vmatprep.subr.mxu0 0.0
    %96 = vmatpush1.msra.mxu0 %v68
    %97 = vmatprep.subr.mxu0 0.0
    %98 = vmatpush1.msra.mxu0 %v69
    %99 = vmatprep.subr.mxu0 0.0
    %100 = vmatpush1.msra.mxu0 %v70
    %101 = vmatprep.subr.mxu0 0.0
    %102 = vmatpush1.msra.mxu0 %v71
    %103 = vmatprep.subr.mxu0 0.0
    %104 = vmatpush1.msra.mxu0 %v72
    %105 = vmatprep.subr.mxu0 0.0
    %106 = vmatpush1.msra.mxu0 %v73
    %107 = vmatprep.subr.mxu0 0.0
    %108 = vmatpush1.msra.mxu0 %v74
    %109 = vmatprep.subr.mxu0 0.0
    %110 = vmatpush1.msra.mxu0 %v75
    %111 = vmatprep.subr.mxu0 0.0
    %112 = vmatpush1.msra.mxu0 %v76
    %113 = vmatprep.subr.mxu0 0.0
    %114 = vmatpush1.msra.mxu0 %v77
    %115 = vmatprep.subr.mxu0 0.0
    %116 = vmatpush1.msra.mxu0 %v78
    %117 = vmatprep.subr.mxu0 0.0
    %118 = vmatpush1.msra.mxu0 %v79
    %119 = vmatprep.subr.mxu0 0.0
    %120 = vmatpush1.msra.mxu0 0.0
    %121 = vmatprep.subr.mxu0 0.0
    %122 = vmatpush1.msra.mxu0 0.0
    %123 = vmatprep.subr.mxu0 0.0
    %124 = vmatpush1.msra.mxu0 0.0
    %125 = vmatprep.subr.mxu0 0.0
    %126 = vmatpush1.msra.mxu0 0.0
    %127 = vmatprep.subr.mxu0 0.0
    %128 = vmatpush1.msra.mxu0 0.0
    %129 = vmatprep.subr.mxu0 0.0
    %130 = vmatpush1.msra.mxu0 0.0
    %131 = vmatprep.subr.mxu0 0.0
    %132 = vmatpush1.msra.mxu0 0.0
    %133 = vmatprep.subr.mxu0 0.0
    %134 = vmatpush1.msra.mxu0 0.0
    %135 = vmatprep.subr.mxu0 0.0
    %136 = vmatpush1.msra.mxu0 0.0
    %137 = vmatprep.subr.mxu0 0.0
    %138 = vmatpush1.msra.mxu0 0.0
    %139 = vmatprep.subr.mxu0 0.0
    %140 = vmatpush1.msra.mxu0 0.0
    %141 = vmatprep.subr.mxu0 0.0
    %142 = vmatpush1.msra.mxu0 0.0
    %143 = vmatprep.subr.mxu0 0.0
    %144 = vmatpush1.msra.mxu0 0.0
    %145 = vmatprep.subr.mxu0 0.0
    %146 = vmatpush1.msra.mxu0 0.0
    %147 = vmatprep.subr.mxu0 0.0
    %148 = vmatpush1.msra.mxu0 0.0
    %149 = vmatprep.subr.mxu0 0.0
    %150 = vmatpush1.msra.mxu0 0.0
    %151 = vmatprep.mubr.f32.mxu0 0.0
    %152 = vmatmul.mubr.f32.gmra.mrb[0].mxu0 %v62
    %v153 = vpop.f32.mrb[0].mxu0
    %v154 = vadd.f32 %v85, %v153
    %v155 = vpop.f32.mrb[0].mxu0
    %156 = vmatprep.mubr.f32.mxu0 0.0
    %157 = vmatmul.mubr.f32.gmra.mrb[0].mxu0 %v63
    %v158 = vpop.f32.mrb[0].mxu0
    %v159 = vadd.f32 %v85, %v158
    %v160 = vpop.f32.mrb[0].mxu0
    %161 = vdwg.mxu0
    %v162 = vmul.f32 %v154, 0.5
    %v163 = vmul.f32 %v159, 0.5
    %v164 = vmul.f32 %v154, 0.70710677
    %v165 = vmul.f32 %v159, 0.70710677
    %v166 = verf.f32.pop %v164
    %v167 = verf.f32.pop %v165
    %v168 = vadd.f32 %v166, 1.0
    %v169 = vadd.f32 %v167, 1.0
    %v170 = vmul.f32 %v162, %v168
    %v171 = vmul.f32 %v163, %v169
    %v172 = vld [vmem:[#allocation7] sm:$0xff]
    %v173 = vld [vmem:[#allocation7 + $0x8] sm:$0xff]
    %v174 = vld [vmem:[#allocation7 + $0x10] sm:$0xff]
    %v175 = vld [vmem:[#allocation7 + $0x18] sm:$0xff]
    %v176 = vld [vmem:[#allocation7 + $0x20] sm:$0xff]
    %v177 = vld [vmem:[#allocation7 + $0x28] sm:$0xff]
    %v178 = vld [vmem:[#allocation7 + $0x30] sm:$0xff]
    %v179 = vld [vmem:[#allocation7 + $0x38] sm:$0xff]
    %v180 = vld [vmem:[#allocation7 + $0x40] sm:$0xff]
    %v181 = vld [vmem:[#allocation7 + $0x48] sm:$0xff]
    %v182 = vld [vmem:[#allocation7 + $0x50] sm:$0xff]
    %v183 = vld [vmem:[#allocation7 + $0x58] sm:$0xff]
    %v184 = vld [vmem:[#allocation7 + $0x60] sm:$0xff]
    %v185 = vld [vmem:[#allocation7 + $0x68] sm:$0xff]
    %v186 = vld [vmem:[#allocation7 + $0x70] sm:$0xff]
    %v187 = vld [vmem:[#allocation7 + $0x78] sm:$0xff]
    %v188 = vld [vmem:[%s4] sm:$0x1]
    %v190 = vlaneseq
    %v191 = vshrl.u32 %v190, 7
    %v192 = vsub.s32 0, %v191
    %v193 = vrot.slane %v188, %v192
    %195 = vmatprep.subr.mxu0 0.0
    %196 = vmatpush1.msra.mxu0 %v172
    %197 = vmatprep.subr.mxu0 0.0
    %198 = vmatpush1.msra.mxu0 %v173
    %199 = vmatprep.subr.mxu0 0.0
    %200 = vmatpush1.msra.mxu0 %v174
    %201 = vmatprep.subr.mxu0 0.0
    %202 = vmatpush1.msra.mxu0 %v175
    %203 = vmatprep.subr.mxu0 0.0
    %204 = vmatpush1.msra.mxu0 %v176
    %205 = vmatprep.subr.mxu0 0.0
    %206 = vmatpush1.msra.mxu0 %v177
    %207 = vmatprep.subr.mxu0 0.0
    %208 = vmatpush1.msra.mxu0 %v178
    %209 = vmatprep.subr.mxu0 0.0
    %210 = vmatpush1.msra.mxu0 %v179
    %211 = vmatprep.subr.mxu0 0.0
    %212 = vmatpush1.msra.mxu0 %v180
    %213 = vmatprep.subr.mxu0 0.0
    %214 = vmatpush1.msra.mxu0 %v181
    %215 = vmatprep.subr.mxu0 0.0
    %216 = vmatpush1.msra.mxu0 %v182
    %217 = vmatprep.subr.mxu0 0.0
    %218 = vmatpush1.msra.mxu0 %v183
    %219 = vmatprep.subr.mxu0 0.0
    %220 = vmatpush1.msra.mxu0 %v184
    %221 = vmatprep.subr.mxu0 0.0
    %222 = vmatpush1.msra.mxu0 %v185
    %223 = vmatprep.subr.mxu0 0.0
    %224 = vmatpush1.msra.mxu0 %v186
    %225 = vmatprep.subr.mxu0 0.0
    %226 = vmatpush1.msra.mxu0 %v187
    %227 = vmatprep.subr.mxu0 0.0
    %228 = vmatpush1.msra.mxu0 0.0
    %229 = vmatprep.subr.mxu0 0.0
    %230 = vmatpush1.msra.mxu0 0.0
    %231 = vmatprep.subr.mxu0 0.0
    %232 = vmatpush1.msra.mxu0 0.0
    %233 = vmatprep.subr.mxu0 0.0
    %234 = vmatpush1.msra.mxu0 0.0
    %235 = vmatprep.subr.mxu0 0.0
    %236 = vmatpush1.msra.mxu0 0.0
    %237 = vmatprep.subr.mxu0 0.0
    %238 = vmatpush1.msra.mxu0 0.0
    %239 = vmatprep.subr.mxu0 0.0
    %240 = vmatpush1.msra.mxu0 0.0
    %241 = vmatprep.subr.mxu0 0.0
    %242 = vmatpush1.msra.mxu0 0.0
    %243 = vmatprep.subr.mxu0 0.0
    %244 = vmatpush1.msra.mxu0 0.0
    %245 = vmatprep.subr.mxu0 0.0
    %246 = vmatpush1.msra.mxu0 0.0
    %247 = vmatprep.subr.mxu0 0.0
    %248 = vmatpush1.msra.mxu0 0.0
    %249 = vmatprep.subr.mxu0 0.0
    %250 = vmatpush1.msra.mxu0 0.0
    %251 = vmatprep.subr.mxu0 0.0
    %252 = vmatpush1.msra.mxu0 0.0
    %253 = vmatprep.subr.mxu0 0.0
    %254 = vmatpush1.msra.mxu0 0.0
    %255 = vmatprep.subr.mxu0 0.0
    %256 = vmatpush1.msra.mxu0 0.0
    %257 = vmatprep.subr.mxu0 0.0
    %258 = vmatpush1.msra.mxu0 0.0
    %259 = vmatprep.mubr.f32.mxu0 0.0
    %260 = vmatmul.mubr.f32.gmra.mrb[0].mxu0 %v170
    %v261 = vpop.f32.mrb[0].mxu0
    %v262 = vadd.f32 %v193, %v261
    %v263 = vpop.f32.mrb[0].mxu0
    %264 = vmatprep.mubr.f32.mxu0 0.0
    %265 = vmatmul.mubr.f32.gmra.mrb[0].mxu0 %v171
    %v266 = vpop.f32.mrb[0].mxu0
    %v267 = vadd.f32 %v193, %v266
    %v268 = vpop.f32.mrb[0].mxu0
    %269 = vdwg.mxu0
    %270 = vst [vmem:[#allocation8] sm:$0xff] %v262
    %271 = vst [vmem:[#allocation8 + $0x8] sm:$0xff] %v267
    // Predicated region
    $region34: #{tpu_custom_call.1} parent=1 // pred_check
      _
    $region35: #{tpu_custom_call.1} parent=1 // pred_check_branch
      %273 = sbr.rel (0) target = $region37
    $region36: #{tpu_custom_call.1} parent=1 // pred_region
      %s275 = ssub.s32 256, 256
      %276 = vsyncadd [#allocation4], %s275
      %s277 = sshll.u32 [#allocation8], 4
      %s278 = int_to_ptr.vmem [resolvable:$true] %s277
      %283 = dma.vmem_to_hbm [thread:$0]  %s278, 256, %s5, [#allocation4], 128, 128, 8
    $region37: #{tpu_custom_call.1} parent=1 // pred_fallthru
      _
    // Predicated region
    $region38: #{tpu_custom_call.1} parent=1 // pred_check
      _
    $region39: #{tpu_custom_call.1} parent=1 // pred_check_branch
      %285 = sbr.rel (0) target = $region41
    $region40: #{tpu_custom_call.1} parent=1 // pred_region
      %286 = dma.done [#allocation4], 256
    $region41: #{tpu_custom_call.1} parent=1 // pred_fallthru
      _
    %287 = vsyncpa [#allocation3], 1
    %288 = vsyncpa [#allocation6], 1
    %289 = vsyncpa [#allocation4], 1

</llo_original>
